<compile_context>
chip_gen: v7x
topology: tpu7x:2x2x1
jax: 0.10.0
libtpu: 0.0.40
codegen_flags: <defaults>
</compile_context>

<pallas_src>
import jax
import jax.numpy as jnp
from jax.experimental import pallas as pl
from jax.experimental.pallas import tpu as pltpu


def _soft_prompt_kernel(prompts_hbm, x_hbm, out_hbm,
                        prompt_vmem, rep_vmem, sems, prefix_sems):
    """Single grid step: out = concat(soft_prompts (bcast), x) via DMAs only."""
    num_tokens, _ = prompts_hbm.shape
    batch, seq, _ = x_hbm.shape
    b_chunk = rep_vmem.shape[0]
    n_chunks = prefix_sems.shape[0]

    # ---- Issue phase: start everything before waiting on anything. ----
    # Small HBM->VMEM staging of the prompt (read exactly once from HBM).
    prompt_load = pltpu.make_async_copy(prompts_hbm, prompt_vmem, sems.at[0])
    # One large strided HBM->HBM copy of all input embeddings into the tail
    # of every output row: dst batch-stride = (num_tokens + seq) * emb.
    x_cp = pltpu.make_async_copy(
        x_hbm,
        out_hbm.at[pl.ds(0, batch), pl.ds(num_tokens, seq), :],
        sems.at[1],
    )
    prompt_load.start()
    x_cp.start()

    # ---- Prefix phase: replicate prompt in VMEM, scatter per batch chunk. ----
    prompt_load.wait()
    rep_vmem[...] = jnp.broadcast_to(prompt_vmem[...], rep_vmem.shape)

    prefix_cps = []
    for c in range(n_chunks):              # static Python loop (n_chunks known)
        b0 = c * b_chunk
        bc = min(b_chunk, batch - b0)
        cp = pltpu.make_async_copy(
            rep_vmem.at[pl.ds(0, bc)],
            out_hbm.at[pl.ds(b0, bc), pl.ds(0, num_tokens), :],
            prefix_sems.at[c],
        )
        cp.start()
        prefix_cps.append(cp)

    # ---- Drain phase: prefix chunks first, the big x copy last. ----
    for cp in prefix_cps:
        cp.wait()
    x_cp.wait()


def soft_prompt_forward(soft_prompts: jax.Array,
                        inputs_embeds: jax.Array,
                        *,
                        prefix_chunk_bytes: int = 4 << 20) -> jax.Array:
    """Equivalent of SoftPrompt.forward.

    soft_prompts:  (num_tokens, embedding_size)
    inputs_embeds: (batch, seq, embedding_size)
    returns:       (batch, num_tokens + seq, embedding_size)
    """
    num_tokens, emb = soft_prompts.shape
    batch, seq, emb_x = inputs_embeds.shape
    assert emb == emb_x, "embedding_size mismatch"
    assert soft_prompts.dtype == inputs_embeds.dtype, "dtype mismatch"
    out_seq = num_tokens + seq

    itemsize = jnp.dtype(inputs_embeds.dtype).itemsize
    # Replicated prompt-prefix staging buffer: cap at a few MiB so it fits the
    # v7x VMEM budget comfortably; loop over batch chunks if batch is huge.
    prefix_row_bytes = max(num_tokens * emb * itemsize, 1)
    b_chunk = max(1, min(batch, prefix_chunk_bytes // prefix_row_bytes))
    n_chunks = -(-batch // b_chunk)  # ceil div

    read_bytes = (num_tokens * emb + batch * seq * emb) * itemsize
    write_bytes = batch * out_seq * emb * itemsize

    return pl.pallas_call(
        _soft_prompt_kernel,
        out_shape=jax.ShapeDtypeStruct((batch, out_seq, emb), inputs_embeds.dtype),
        grid_spec=pltpu.PrefetchScalarGridSpec(
            num_scalar_prefetch=0,
            grid=(1,),  # single step: all transfers issued from one kernel body
            in_specs=[
                pl.BlockSpec(memory_space=pl.ANY),   # soft prompts stay in HBM
                pl.BlockSpec(memory_space=pl.ANY),   # inputs_embeds stay in HBM
            ],
            out_specs=pl.BlockSpec(memory_space=pl.ANY),  # output written via DMA
            scratch_shapes=[
                pltpu.VMEM((num_tokens, emb), inputs_embeds.dtype),            # staged prompt
                pltpu.VMEM((b_chunk, num_tokens, emb), inputs_embeds.dtype),   # replicated prefix
                pltpu.SemaphoreType.DMA((2,)),         # [0]=prompt load, [1]=bulk x copy
                pltpu.SemaphoreType.DMA((n_chunks,)),  # one per prefix chunk DMA
            ],
        ),
        compiler_params=pltpu.CompilerParams(
            dimension_semantics=("arbitrary",),
        ),
        cost_estimate=pl.CostEstimate(
            flops=0,
            transcendentals=0,
            bytes_accessed=read_bytes + write_bytes,
        ),
    )(soft_prompts, inputs_embeds)


if __name__ == "__main__":
    # Small, deterministic shapes consistent with the module's forward.
    # Lane-dense (emb % 128 == 0) and sublane-aligned (num_tokens % 8 == 0 for
    # f32) so all DMAs hit the full-speed contiguous path.
    batch = 2
    seq = 32
    embedding_size = 128
    num_tokens = 8

    key = jax.random.PRNGKey(0)
    k_prompt, k_x = jax.random.split(key)

    # Deterministic "parameter" init (torch.randn equivalent).
    soft_prompts = jax.random.normal(k_prompt, (num_tokens, embedding_size), dtype=jnp.float32)
    inputs_embeds = jax.random.normal(k_x, (batch, seq, embedding_size), dtype=jnp.float32)

    out = soft_prompt_forward(soft_prompts, inputs_embeds)
    out = jax.block_until_ready(out)

    # Reference check in plain JAX (concat of broadcast prompts + inputs).
    ref = jnp.concatenate(
        [jnp.broadcast_to(soft_prompts[None], (batch, num_tokens, embedding_size)), inputs_embeds],
        axis=1,
    )
    assert out.shape == (batch, num_tokens + seq, embedding_size)
    assert jnp.allclose(out, ref), "mismatch vs reference"

    print("KERNEL_OK")
</pallas_src>

<mosaic_0001>
module attributes {stable_mosaic.version = 11 : i64} {
  func.func @_soft_prompt_kernel(%arg0: i32, %arg1: memref<8x128xf32, #tpu.memory_space<any>>, %arg2: memref<2x32x128xf32, #tpu.memory_space<any>>, %arg3: memref<2x40x128xf32, #tpu.memory_space<any>>, %arg4: memref<8x128xf32, #tpu.memory_space<vmem>>, %arg5: memref<2x8x128xf32, #tpu.memory_space<vmem>>, %arg6: memref<2x!tpu.dma_semaphore, #tpu.memory_space<semaphore_mem>>, %arg7: memref<1x!tpu.dma_semaphore, #tpu.memory_space<semaphore_mem>>) attributes {dimension_semantics = [#tpu.dimension_semantics<arbitrary>], iteration_bounds = array<i64: 1>, scalar_prefetch = 0 : i64, scratch_operands = 4 : i64, tpu.core_type = #tpu.core_type<tc>, window_params = [{}, {}, {}]} {
    %c0_i32 = arith.constant 0 : i32
    %0 = tpu.memref_slice %arg6[%c0_i32] : memref<2x!tpu.dma_semaphore, #tpu.memory_space<semaphore_mem>> -> memref<1x!tpu.dma_semaphore, #tpu.memory_space<semaphore_mem>>
    %1 = tpu.memref_squeeze %0 : memref<1x!tpu.dma_semaphore, #tpu.memory_space<semaphore_mem>> -> memref<!tpu.dma_semaphore, #tpu.memory_space<semaphore_mem>>
    tpu.enqueue_dma source(%arg1 : memref<8x128xf32, #tpu.memory_space<any>>) target(%arg4 : memref<8x128xf32, #tpu.memory_space<vmem>>) target_semaphore(%1 : memref<!tpu.dma_semaphore, #tpu.memory_space<semaphore_mem>>)
    %c1_i32 = arith.constant 1 : i32
    %c0_i32_0 = arith.constant 0 : i32
    %c8_i32 = arith.constant 8 : i32
    %c0_i32_1 = arith.constant 0 : i32
    %2 = tpu.memref_slice %arg3[%c0_i32_0, %c8_i32, %c0_i32_1] : memref<2x40x128xf32, #tpu.memory_space<any>> -> memref<2x32x128xf32, #tpu.memory_space<any>>
    %3 = tpu.memref_slice %arg6[%c1_i32] : memref<2x!tpu.dma_semaphore, #tpu.memory_space<semaphore_mem>> -> memref<1x!tpu.dma_semaphore, #tpu.memory_space<semaphore_mem>>
    %4 = tpu.memref_squeeze %3 : memref<1x!tpu.dma_semaphore, #tpu.memory_space<semaphore_mem>> -> memref<!tpu.dma_semaphore, #tpu.memory_space<semaphore_mem>>
    tpu.enqueue_dma source(%arg2 : memref<2x32x128xf32, #tpu.memory_space<any>>) target(%2 : memref<2x32x128xf32, #tpu.memory_space<any>>) target_semaphore(%4 : memref<!tpu.dma_semaphore, #tpu.memory_space<semaphore_mem>>)
    %c0_i32_2 = arith.constant 0 : i32
    %5 = tpu.memref_slice %arg6[%c0_i32_2] : memref<2x!tpu.dma_semaphore, #tpu.memory_space<semaphore_mem>> -> memref<1x!tpu.dma_semaphore, #tpu.memory_space<semaphore_mem>>
    %6 = tpu.memref_squeeze %5 : memref<1x!tpu.dma_semaphore, #tpu.memory_space<semaphore_mem>> -> memref<!tpu.dma_semaphore, #tpu.memory_space<semaphore_mem>>
    tpu.wait_dma2 semaphore(%6 : memref<!tpu.dma_semaphore, #tpu.memory_space<semaphore_mem>>) src(%arg1 : memref<8x128xf32, #tpu.memory_space<any>>) dst(%arg4 : memref<8x128xf32, #tpu.memory_space<vmem>>)
    %c0 = arith.constant 0 : index
    %c0_3 = arith.constant 0 : index
    %7 = vector.load %arg4[%c0, %c0_3] : memref<8x128xf32, #tpu.memory_space<vmem>>, vector<8x128xf32>
    %8 = vector.shape_cast %7 : vector<8x128xf32> to vector<1x8x128xf32>
    %9 = vector.broadcast %8 : vector<1x8x128xf32> to vector<2x8x128xf32>
    %c0_4 = arith.constant 0 : index
    %c0_5 = arith.constant 0 : index
    %c0_6 = arith.constant 0 : index
    %10 = vector.load %arg5[%c0_4, %c0_5, %c0_6] : memref<2x8x128xf32, #tpu.memory_space<vmem>>, vector<2x8x128xf32>
    tpu.vector_store %arg5[%c0_4, %c0_5, %c0_6], %9 {strides = array<i32>} : memref<2x8x128xf32, #tpu.memory_space<vmem>>, vector<2x8x128xf32>,
    %c0_i32_7 = arith.constant 0 : i32
    %c0_i32_8 = arith.constant 0 : i32
    %c0_i32_9 = arith.constant 0 : i32
    %c0_i32_10 = arith.constant 0 : i32
    %11 = tpu.memref_slice %arg5[%c0_i32_8, %c0_i32_9, %c0_i32_10] : memref<2x8x128xf32, #tpu.memory_space<vmem>> -> memref<2x8x128xf32, #tpu.memory_space<vmem>>
    %c0_i32_11 = arith.constant 0 : i32
    %c0_i32_12 = arith.constant 0 : i32
    %c0_i32_13 = arith.constant 0 : i32
    %12 = tpu.memref_slice %arg3[%c0_i32_11, %c0_i32_12, %c0_i32_13] : memref<2x40x128xf32, #tpu.memory_space<any>> -> memref<2x8x128xf32, #tpu.memory_space<any>>
    %13 = tpu.memref_slice %arg7[%c0_i32_7] : memref<1x!tpu.dma_semaphore, #tpu.memory_space<semaphore_mem>> -> memref<1x!tpu.dma_semaphore, #tpu.memory_space<semaphore_mem>>
    %14 = tpu.memref_squeeze %13 : memref<1x!tpu.dma_semaphore, #tpu.memory_space<semaphore_mem>> -> memref<!tpu.dma_semaphore, #tpu.memory_space<semaphore_mem>>
    tpu.enqueue_dma source(%11 : memref<2x8x128xf32, #tpu.memory_space<vmem>>) target(%12 : memref<2x8x128xf32, #tpu.memory_space<any>>) target_semaphore(%14 : memref<!tpu.dma_semaphore, #tpu.memory_space<semaphore_mem>>)
    %c0_i32_14 = arith.constant 0 : i32
    %c0_i32_15 = arith.constant 0 : i32
    %c0_i32_16 = arith.constant 0 : i32
    %c0_i32_17 = arith.constant 0 : i32
    %15 = tpu.memref_slice %arg5[%c0_i32_15, %c0_i32_16, %c0_i32_17] : memref<2x8x128xf32, #tpu.memory_space<vmem>> -> memref<2x8x128xf32, #tpu.memory_space<vmem>>
    %c0_i32_18 = arith.constant 0 : i32
    %c0_i32_19 = arith.constant 0 : i32
    %c0_i32_20 = arith.constant 0 : i32
    %16 = tpu.memref_slice %arg3[%c0_i32_18, %c0_i32_19, %c0_i32_20] : memref<2x40x128xf32, #tpu.memory_space<any>> -> memref<2x8x128xf32, #tpu.memory_space<any>>
    %17 = tpu.memref_slice %arg7[%c0_i32_14] : memref<1x!tpu.dma_semaphore, #tpu.memory_space<semaphore_mem>> -> memref<1x!tpu.dma_semaphore, #tpu.memory_space<semaphore_mem>>
    %18 = tpu.memref_squeeze %17 : memref<1x!tpu.dma_semaphore, #tpu.memory_space<semaphore_mem>> -> memref<!tpu.dma_semaphore, #tpu.memory_space<semaphore_mem>>
    tpu.wait_dma2 semaphore(%18 : memref<!tpu.dma_semaphore, #tpu.memory_space<semaphore_mem>>) src(%15 : memref<2x8x128xf32, #tpu.memory_space<vmem>>) dst(%16 : memref<2x8x128xf32, #tpu.memory_space<any>>)
    %c1_i32_21 = arith.constant 1 : i32
    %c0_i32_22 = arith.constant 0 : i32
    %c8_i32_23 = arith.constant 8 : i32
    %c0_i32_24 = arith.constant 0 : i32
    %19 = tpu.memref_slice %arg3[%c0_i32_22, %c8_i32_23, %c0_i32_24] : memref<2x40x128xf32, #tpu.memory_space<any>> -> memref<2x32x128xf32, #tpu.memory_space<any>>
    %20 = tpu.memref_slice %arg6[%c1_i32_21] : memref<2x!tpu.dma_semaphore, #tpu.memory_space<semaphore_mem>> -> memref<1x!tpu.dma_semaphore, #tpu.memory_space<semaphore_mem>>
    %21 = tpu.memref_squeeze %20 : memref<1x!tpu.dma_semaphore, #tpu.memory_space<semaphore_mem>> -> memref<!tpu.dma_semaphore, #tpu.memory_space<semaphore_mem>>
    tpu.wait_dma2 semaphore(%21 : memref<!tpu.dma_semaphore, #tpu.memory_space<semaphore_mem>>) src(%arg2 : memref<2x32x128xf32, #tpu.memory_space<any>>) dst(%19 : memref<2x32x128xf32, #tpu.memory_space<any>>)
    return
  }
}

</mosaic_0001>

<llo_original>
// kernel: tpu_custom_call.1
$region0: #{tpu_custom_call.1}
  #allocation0 [shape = 'u32[]', space=smem, size = 0x4, offset = 0x4, fixed_abs, tag = 'smem constant byte address 0x4 - core index']
  #allocation1 [shape = 'u32[144,128]{1,0:T(1,128)}', space=vmem, size = 0x12000, scoped, tag = 'internal scratch']
  #allocation2 [shape = 'f32[8,128]{1,0:T(8,128)}', space=vmem, size = 0x1000, scoped, tag = 'scratch operand']
  #allocation3 [shape = 'f32[2,8,128]{2,1,0:T(8,128)}', space=vmem, size = 0x2000, scoped, tag = 'scratch operand']
  #allocation4 [shape = 's32[2]{0}', space=sflag, size = 0x8, scoped, tag = 'scratch operand']
  #allocation5 [shape = 's32[1]{0}', space=sflag, size = 0x4, scoped, tag = 'scratch operand']
  #allocation6 [shape = 's32[]', space=sflag, size = 0x4, offset = 0, fixed_abs, tag = 'sflag constant byte address 0x0 - dummy sync flag']
  #allocation7 [shape = 's32[]', space=sflag, size = 0x4, offset = 0, fixed_abs, tag = 'sflag constant byte address 0x0 - dummy sync flag']
  #allocation8 [shape = 'u32[]', space=smem, size = 0x4, offset = 0x44, fixed_abs, tag = 'smem constant byte address 0x44 - assertion arg 0']
  #allocation9 [shape = 'u32[]', space=smem, size = 0x4, offset = 0x48, fixed_abs, tag = 'smem constant byte address 0x48 - assertion arg 1']
  #allocation10 [shape = 's32[]', space=sflag, size = 0x4, offset = 0, fixed_abs, tag = 'sflag constant byte address 0x0 - dummy sync flag']
  #allocation12 [shape = 's32[]', space=sflag, size = 0x4, offset = 0, fixed_abs, tag = 'sflag constant byte address 0x0 - dummy sync flag']
  %s0 = inlined_call_operand.hbm [shape: f32[8,128], index: 0, kind: input, shape index: {}]
  %s1 = inlined_call_operand.hbm [shape: f32[2,32,128], index: 1, kind: input, shape index: {}]
  %s2 = inlined_call_operand.hbm [shape: f32[2,40,128], index: 2, kind: output, shape index: {}]
  %s3 = sld [smem:[#allocation0]]
  $region6: #{tpu_custom_call.1} parent=0
    _
  %s5 = ssub.s32 1, %s3
  %s6 = scalar_select 0, %s5, %s3
  $region1: #{tpu_custom_call.1} parent=0
    #allocation11 [shape = 'u32[3]{0}', space=smem, size = 0xc, scoped, tag = 'DMA stride descriptor']
    // Predicated region
    $region2: #{tpu_custom_call.1} parent=1 // pred_check
      _
    $region3: #{tpu_custom_call.1} parent=1 // pred_check_branch
      %8 = sbr.rel target = $region5
    $region4: #{tpu_custom_call.1} parent=1 // pred_region
      %9 = sst [smem:[#allocation8]] [#allocation7]
      %10 = sst [smem:[#allocation9]] [#allocation6]
    $region5: #{tpu_custom_call.1} parent=1 // pred_fallthru
      _
    %12 = shalt.err (0)
    %s14 = sshll.u32 [#allocation2], 4
    %s15 = int_to_ptr.vmem [resolvable:$true] %s14
    %17 = dma.hbm_to_vmem [thread:$0]  %s0, 128, %s15, [#allocation4]
    %s18 = scalar_lea.hbm %s2, 128
    %s19 = scalar_lea.sflag [#allocation4], 1
    %s21 = sshll.u32 1, 14
    %s22 = sxor.u32 4294967295, %s21
    %s25 = sshll.u32 3, 24
    %s26 = sxor.u32 4294967295, %s25
    %s27 = sand.u32 0, %s26
    %s29 = sor.u32 %s27, 0
    %32 = sst [smem:[#allocation11]] 512
    %s33 = scalar_lea.smem [#allocation11], 1
    %34 = sst [smem:[%s33]] 640
    %s35 = scalar_lea.smem [#allocation11], 2
    %36 = sst [smem:[%s35]] 32
    %38 = dma.general %s1, 1024, %s18, %s19, [#allocation10], [#allocation11], %s29, 0
    %s39 = smul.u32 8, 1
    %s40 = sshll.u32 %s39, 4
    %41 = dma.done [#allocation4], %s40
    %v42 = vld [vmem:[#allocation2] sm:$0xff]
    %43 = vst [vmem:[#allocation3] sm:$0xff] %v42
    %44 = vst [vmem:[#allocation3 + $0x8] sm:$0xff] %v42
    %s46 = sshll.u32 [#allocation3], 4
    %s47 = int_to_ptr.vmem [resolvable:$true] %s46
    %49 = dma.vmem_to_hbm [thread:$0]  %s47, 256, %s2, [#allocation5], 128, 640, 8
    %s50 = smul.u32 2, 8
    %s51 = smul.u32 %s50, 1
    %s52 = sshll.u32 %s51, 4
    %53 = dma.done [#allocation5], %s52
    %s54 = smul.u32 2, 32
    %s55 = smul.u32 %s54, 1
    %s56 = sshll.u32 %s55, 4
    %57 = dma.done %s19, %s56
  %58 = vsyncmov [#allocation4]
  %s59 = vpop.sfrf %58
  %p60 = scmp.eq.s32.totalorder %s59, 0
  %p61 = pneg %p60
  %63 = shalt.err (%p61)
  %s64 = scalar_lea.sflag [#allocation4], 1
  %65 = vsyncmov %s64
  %s66 = vpop.sfrf %65
  %p67 = scmp.eq.s32.totalorder %s66, 0
  %p68 = pneg %p67
  %70 = shalt.err (%p68)
  %71 = vsyncmov [#allocation5]
  %s72 = vpop.sfrf %71
  %p73 = scmp.eq.s32.totalorder %s72, 0
  %p74 = pneg %p73
  %76 = shalt.err (%p74)

</llo_original>
